<compile_context>
chip_gen: v5e
topology: v5e:2x2
jax: 0.10.0
libtpu: 0.0.40
codegen_flags: <defaults>
</compile_context>

<pallas_src>
import jax
import jax.numpy as jnp
from jax.experimental import pallas as pl
from jax.experimental.pallas import tpu as pltpu

INTERM_DIM = 16
DEFAULT_BLOCK_B = 4096   # rows per grid step (safe on v7x; raise on v5e/v6e)
_SINGLE_TILE_MAX = 2048  # above this, force >=2 grid steps (v7x megacore)


def lossnet_kernel(
    f1_ref, f2_ref, f3_ref,        # inputs          (TB,64) (TB,32) (TB,16)
    w1_ref, w2_ref, w3_ref,        # block-diag fc   (64,3D) (32,3D) (16,3D)
    b_ref,                         # [b1|b2|b3]      (1,3D)  f32
    wl_ref,                        # head row        (1,3D)  f32
    bl_ref,                        # head bias       (1,1)   f32, SMEM
    out_ref,                       # output          (TB,1)
):
    cdt = w1_ref.dtype             # compute dtype for the MXU (bf16 or f32)
    acc = jnp.dot(f1_ref[...].astype(cdt), w1_ref[...],
                  preferred_element_type=jnp.float32)
    acc = acc + jnp.dot(f2_ref[...].astype(cdt), w2_ref[...],
                        preferred_element_type=jnp.float32)
    acc = acc + jnp.dot(f3_ref[...].astype(cdt), w3_ref[...],
                        preferred_element_type=jnp.float32)
    # Block-diagonal weights => acc == concat([f1@W1, f2@W2, f3@W3], axis=1).
    x_cat = jnp.maximum(acc + b_ref[...], 0.0)                    # (TB,3D) f32
    # Head: concat @ wl done as VPU multiply + XLU lane reduce (no N=1 matmul).
    y = jnp.sum(x_cat * wl_ref[...], axis=1, keepdims=True) + bl_ref[0, 0]
    out_ref[...] = y.astype(out_ref.dtype)


def lossnet_forward(features, params, block_b=DEFAULT_BLOCK_B,
                    compute_dtype=jnp.bfloat16):
    f1, f2, f3 = features
    B = f1.shape[0]
    D = params["w1"].shape[1]                      # interm_dim
    d1, d2, d3 = f1.shape[1], f2.shape[1], f3.shape[1]

    # ---- tile selection -----------------------------------------------------
    if B <= min(block_b, _SINGLE_TILE_MAX):
        tb = B                                     # one full-array block (legal)
    else:
        half = -(-B // 2)                          # ceil(B/2): >=2 steps for v7x
        half = -(-half // 8) * 8                   # sublane alignment
        tb = min(block_b, half)
        tb = max(8, (tb // 8) * 8)                 # partial-grid blocks need tb%8==0
    grid = (pl.cdiv(B, tb),)                       # ragged tail masked by Pallas

    # ---- parameter prep (tiny, once per call) -------------------------------
    def blockdiag(w, col):                         # (in,D) -> (in,3D), cast
        z = jnp.zeros((w.shape[0], 3 * D), dtype=compute_dtype)
        return z.at[:, col:col + D].set(w.astype(compute_dtype))

    w1p = blockdiag(params["w1"], 0)
    w2p = blockdiag(params["w2"], D)
    w3p = blockdiag(params["w3"], 2 * D)
    b_cat = jnp.concatenate(
        [params["b1"], params["b2"], params["b3"]], axis=1).astype(jnp.float32)
    wl_row = params["wl"].reshape(1, 3 * D).astype(jnp.float32)   # (3D,1) -> (1,3D)

    row = lambda i: (i, 0)                         # batch-tiled operands
    rep = lambda i: (0, 0)                         # params: VMEM-resident

    # Scoped-VMEM budget: (3 in + 1 out) blocks, 128-lane padded f32, double
    # buffered (~8 KiB/row) + (TB,3D) f32 intermediates + headroom.
    vmem_limit = min(max(16 << 20, tb * 10 * 1024 + (8 << 20)), 96 << 20)

    out = pl.pallas_call(
        lossnet_kernel,
        out_shape=jax.ShapeDtypeStruct((B, 1), jnp.float32),
        grid=grid,
        in_specs=[
            pl.BlockSpec((tb, d1), row),
            pl.BlockSpec((tb, d2), row),
            pl.BlockSpec((tb, d3), row),
            pl.BlockSpec((d1, 3 * D), rep),
            pl.BlockSpec((d2, 3 * D), rep),
            pl.BlockSpec((d3, 3 * D), rep),
            pl.BlockSpec((1, 3 * D), rep),
            pl.BlockSpec((1, 3 * D), rep),
            pl.BlockSpec(memory_space=pltpu.MemorySpace.SMEM),   # bl scalar
        ],
        out_specs=pl.BlockSpec((tb, 1), row),
        compiler_params=pltpu.CompilerParams(
            dimension_semantics=("parallel",),     # shard batch tiles across TCs
            vmem_limit_bytes=vmem_limit,
        ),
    )(f1, f2, f3, w1p, w2p, w3p, b_cat, wl_row, params["bl"])
    return out


def init_params(key, interm_dim=INTERM_DIM):
    # Deterministic synthetic parameters; weights stored as (in_dim, out_dim).
    ks = jax.random.split(key, 8)

    def lin(kw, kb, in_dim, out_dim):
        scale = 1.0 / jnp.sqrt(in_dim)
        w = jax.random.uniform(kw, (in_dim, out_dim), jnp.float32, -scale, scale)
        b = jax.random.uniform(kb, (1, out_dim), jnp.float32, -scale, scale)
        return w, b

    w1, b1 = lin(ks[0], ks[1], 64, interm_dim)
    w2, b2 = lin(ks[2], ks[3], 32, interm_dim)
    w3, b3 = lin(ks[4], ks[5], 16, interm_dim)
    wl, bl = lin(ks[6], ks[7], 3 * interm_dim, 1)
    return {"w1": w1, "b1": b1, "w2": w2, "b2": b2,
            "w3": w3, "b3": b3, "wl": wl, "bl": bl}


def lossnet_ref(features, params):
    # Pure-JAX reference (mirrors the PyTorch forward exactly, full f32).
    f1, f2, f3 = features
    x1 = jnp.maximum(f1 @ params["w1"] + params["b1"], 0.0)
    x2 = jnp.maximum(f2 @ params["w2"] + params["b2"], 0.0)
    x3 = jnp.maximum(f3 @ params["w3"] + params["b3"], 0.0)
    x = jnp.concatenate((x1, x2, x3), axis=1)
    return x @ params["wl"] + params["bl"]


if __name__ == "__main__":
    key = jax.random.PRNGKey(0)
    k_params, k1, k2, k3, k4, k5, k6, k7, k8, k9 = jax.random.split(key, 10)

    params = init_params(k_params)

    def make_feats(ka, kb, kc, B):
        return (jax.random.normal(ka, (B, 64), jnp.float32),
                jax.random.normal(kb, (B, 32), jnp.float32),
                jax.random.normal(kc, (B, 16), jnp.float32))

    # 1) Small single-tile case (B=8) — shapes implied by the module; exact f32.
    feats = make_feats(k1, k2, k3, 8)
    out = jax.block_until_ready(
        lossnet_forward(feats, params, compute_dtype=jnp.float32))
    ref = lossnet_ref(feats, params)
    assert out.shape == (8, 1), out.shape
    assert jnp.allclose(out, ref, atol=5e-3, rtol=5e-3), "mismatch (small, f32)"

    # 2) Multi-tile + ragged last block (B=300, tb=128 -> 128/128/44), f32 path.
    #    Exercises boundary masking with no jnp.pad copy.
    feats = make_feats(k4, k5, k6, 300)
    out = jax.block_until_ready(
        lossnet_forward(feats, params, block_b=128, compute_dtype=jnp.float32))
    ref = lossnet_ref(feats, params)
    assert out.shape == (300, 1), out.shape
    assert jnp.allclose(out, ref, atol=5e-3, rtol=5e-3), "mismatch (tiled, f32)"

    # 3) Default production config: bf16 operands, TB=4096, grid of 3 with a
    #    ragged tail (B=10000 -> 4096/4096/1808); validates the default VMEM
    #    budget actually compiles and runs.
    feats = make_feats(k7, k8, k9, 10000)
    out = jax.block_until_ready(lossnet_forward(feats, params))
    ref = lossnet_ref(feats, params)
    assert out.shape == (10000, 1), out.shape
    assert jnp.allclose(out, ref, atol=5e-2, rtol=5e-2), "mismatch (bf16 default)"

    print("KERNEL_OK")
</pallas_src>

<mosaic_0001>
module attributes {stable_mosaic.version = 11 : i64} {
  func.func @lossnet_kernel(%arg0: i32, %arg1: memref<8x64xf32, #tpu.memory_space<vmem>>, %arg2: memref<8x32xf32, #tpu.memory_space<vmem>>, %arg3: memref<8x16xf32, #tpu.memory_space<vmem>>, %arg4: memref<64x48xf32, #tpu.memory_space<vmem>>, %arg5: memref<32x48xf32, #tpu.memory_space<vmem>>, %arg6: memref<16x48xf32, #tpu.memory_space<vmem>>, %arg7: memref<1x48xf32, #tpu.memory_space<vmem>>, %arg8: memref<1x48xf32, #tpu.memory_space<vmem>>, %arg9: memref<1x1xf32, #tpu.memory_space<smem>>, %arg10: memref<8x1xf32, #tpu.memory_space<vmem>>) attributes {dimension_semantics = [#tpu.dimension_semantics<parallel>], iteration_bounds = array<i64: 1>, scalar_prefetch = 0 : i64, scratch_operands = 0 : i64, tpu.core_type = #tpu.core_type<tc>, window_params = [{transform_indices = @transform_0, window_bounds = array<i64: 8, 64>}, {transform_indices = @transform_1, window_bounds = array<i64: 8, 32>}, {transform_indices = @transform_2, window_bounds = array<i64: 8, 16>}, {pipeline_mode = #tpu.pipeline_mode<synchronous>, transform_indices = @transform_3, window_bounds = array<i64: 64, 48>}, {pipeline_mode = #tpu.pipeline_mode<synchronous>, transform_indices = @transform_4, window_bounds = array<i64: 32, 48>}, {pipeline_mode = #tpu.pipeline_mode<synchronous>, transform_indices = @transform_5, window_bounds = array<i64: 16, 48>}, {pipeline_mode = #tpu.pipeline_mode<synchronous>, transform_indices = @transform_6, window_bounds = array<i64: 1, 48>}, {pipeline_mode = #tpu.pipeline_mode<synchronous>, transform_indices = @transform_7, window_bounds = array<i64: 1, 48>}, {transform_indices = @transform_8, window_bounds = array<i64: 1, 1>}, {transform_indices = @transform_9, window_bounds = array<i64: 8, 1>}]} {
    %c0 = arith.constant 0 : index
    %c0_0 = arith.constant 0 : index
    %0 = vector.load %arg1[%c0, %c0_0] : memref<8x64xf32, #tpu.memory_space<vmem>>, vector<8x64xf32>
    %c0_1 = arith.constant 0 : index
    %c0_2 = arith.constant 0 : index
    %1 = vector.load %arg4[%c0_1, %c0_2] : memref<64x48xf32, #tpu.memory_space<vmem>>, vector<64x48xf32>
    %cst = arith.constant dense<0.000000e+00> : vector<8x48xf32>
    %2 = tpu.matmul %0, %1, %cst {dimension_numbers = #tpu.dot_dimension_numbers<[1], [0], [0], [1], [0, 0, 1, 1], [], []>} : vector<8x64xf32>, vector<64x48xf32>, vector<8x48xf32> -> vector<8x48xf32>
    %c0_3 = arith.constant 0 : index
    %c0_4 = arith.constant 0 : index
    %3 = vector.load %arg2[%c0_3, %c0_4] : memref<8x32xf32, #tpu.memory_space<vmem>>, vector<8x32xf32>
    %c0_5 = arith.constant 0 : index
    %c0_6 = arith.constant 0 : index
    %4 = vector.load %arg5[%c0_5, %c0_6] : memref<32x48xf32, #tpu.memory_space<vmem>>, vector<32x48xf32>
    %cst_7 = arith.constant dense<0.000000e+00> : vector<8x48xf32>
    %5 = tpu.matmul %3, %4, %cst_7 {dimension_numbers = #tpu.dot_dimension_numbers<[1], [0], [0], [1], [0, 0, 1, 1], [], []>} : vector<8x32xf32>, vector<32x48xf32>, vector<8x48xf32> -> vector<8x48xf32>
    %6 = arith.addf %2, %5 : vector<8x48xf32>
    %c0_8 = arith.constant 0 : index
    %c0_9 = arith.constant 0 : index
    %7 = vector.load %arg3[%c0_8, %c0_9] : memref<8x16xf32, #tpu.memory_space<vmem>>, vector<8x16xf32>
    %c0_10 = arith.constant 0 : index
    %c0_11 = arith.constant 0 : index
    %8 = vector.load %arg6[%c0_10, %c0_11] : memref<16x48xf32, #tpu.memory_space<vmem>>, vector<16x48xf32>
    %cst_12 = arith.constant dense<0.000000e+00> : vector<8x48xf32>
    %9 = tpu.matmul %7, %8, %cst_12 {dimension_numbers = #tpu.dot_dimension_numbers<[1], [0], [0], [1], [0, 0, 1, 1], [], []>} : vector<8x16xf32>, vector<16x48xf32>, vector<8x48xf32> -> vector<8x48xf32>
    %10 = arith.addf %6, %9 : vector<8x48xf32>
    %c0_13 = arith.constant 0 : index
    %c0_14 = arith.constant 0 : index
    %11 = vector.load %arg7[%c0_13, %c0_14] : memref<1x48xf32, #tpu.memory_space<vmem>>, vector<1x48xf32>
    %12 = vector.broadcast %11 : vector<1x48xf32> to vector<8x48xf32>
    %13 = arith.addf %10, %12 : vector<8x48xf32>
    %cst_15 = arith.constant 0.000000e+00 : f32
    %14 = vector.broadcast %cst_15 : f32 to vector<8x48xf32>
    %15 = arith.maximumf %13, %14 : vector<8x48xf32>
    %c0_16 = arith.constant 0 : index
    %c0_17 = arith.constant 0 : index
    %16 = vector.load %arg8[%c0_16, %c0_17] : memref<1x48xf32, #tpu.memory_space<vmem>>, vector<1x48xf32>
    %17 = vector.broadcast %16 : vector<1x48xf32> to vector<8x48xf32>
    %18 = arith.mulf %15, %17 : vector<8x48xf32>
    %cst_18 = arith.constant dense<0.000000e+00> : vector<8xf32>
    %19 = vector.multi_reduction <add>, %18, %cst_18 [1] : vector<8x48xf32> to vector<8xf32>
    %20 = vector.shape_cast %19 : vector<8xf32> to vector<8x1xf32>
    %c0_19 = arith.constant 0 : index
    %c0_20 = arith.constant 0 : index
    %21 = memref.load %arg9[%c0_19, %c0_20] : memref<1x1xf32, #tpu.memory_space<smem>>
    %22 = vector.broadcast %21 : f32 to vector<8x1xf32>
    %23 = arith.addf %20, %22 : vector<8x1xf32>
    %c0_21 = arith.constant 0 : index
    %c0_22 = arith.constant 0 : index
    %24 = vector.load %arg10[%c0_21, %c0_22] : memref<8x1xf32, #tpu.memory_space<vmem>>, vector<8x1xf32>
    tpu.vector_store %arg10[%c0_21, %c0_22], %23 {strides = array<i32>} : memref<8x1xf32, #tpu.memory_space<vmem>>, vector<8x1xf32>,
    return
  }
  func.func @transform_0(%arg0: i32) -> (i32, i32) {
    %c0_i32 = arith.constant 0 : i32
    %c0_i32_0 = arith.constant 0 : i32
    return %arg0, %c0_i32 : i32, i32
  }
  func.func @transform_1(%arg0: i32) -> (i32, i32) {
    %c0_i32 = arith.constant 0 : i32
    %c0_i32_0 = arith.constant 0 : i32
    return %arg0, %c0_i32 : i32, i32
  }
  func.func @transform_2(%arg0: i32) -> (i32, i32) {
    %c0_i32 = arith.constant 0 : i32
    %c0_i32_0 = arith.constant 0 : i32
    return %arg0, %c0_i32 : i32, i32
  }
  func.func @transform_3(%arg0: i32) -> (i32, i32) {
    %c0_i32 = arith.constant 0 : i32
    %c0_i32_0 = arith.constant 0 : i32
    %c0_i32_1 = arith.constant 0 : i32
    return %c0_i32, %c0_i32_0 : i32, i32
  }
  func.func @transform_4(%arg0: i32) -> (i32, i32) {
    %c0_i32 = arith.constant 0 : i32
    %c0_i32_0 = arith.constant 0 : i32
    %c0_i32_1 = arith.constant 0 : i32
    return %c0_i32, %c0_i32_0 : i32, i32
  }
  func.func @transform_5(%arg0: i32) -> (i32, i32) {
    %c0_i32 = arith.constant 0 : i32
    %c0_i32_0 = arith.constant 0 : i32
    %c0_i32_1 = arith.constant 0 : i32
    return %c0_i32, %c0_i32_0 : i32, i32
  }
  func.func @transform_6(%arg0: i32) -> (i32, i32) {
    %c0_i32 = arith.constant 0 : i32
    %c0_i32_0 = arith.constant 0 : i32
    %c0_i32_1 = arith.constant 0 : i32
    return %c0_i32, %c0_i32_0 : i32, i32
  }
  func.func @transform_7(%arg0: i32) -> (i32, i32) {
    %c0_i32 = arith.constant 0 : i32
    %c0_i32_0 = arith.constant 0 : i32
    %c0_i32_1 = arith.constant 0 : i32
    return %c0_i32, %c0_i32_0 : i32, i32
  }
  func.func @transform_8(%arg0: i32) -> (i32, i32) {
    %c0_i32 = arith.constant 0 : i32
    %c0_i32_0 = arith.constant 0 : i32
    %c0_i32_1 = arith.constant 0 : i32
    return %c0_i32, %c0_i32_0 : i32, i32
  }
  func.func @transform_9(%arg0: i32) -> (i32, i32) {
    %c0_i32 = arith.constant 0 : i32
    %c0_i32_0 = arith.constant 0 : i32
    return %arg0, %c0_i32 : i32, i32
  }
}

</mosaic_0001>

<llo_original>
// kernel: tpu_custom_call.1
$region0: #{tpu_custom_call.1}
  #allocation0 [shape = 'u32[]', space=smem, size = 0x4, offset = 0x4, fixed_abs, tag = 'smem constant byte address 0x4 - core index']
  #allocation1 [shape = 'u32[72,128]{1,0:T(1,128)}', space=vmem, size = 0x9000, scoped, tag = 'internal scratch']
  #allocation2 [shape = 'f32[1,1]{1,0:T(1,128)S(6)}', space=smem, size = 0x200, scoped, tag = 'scoped memory for tpu_custom_call.1']
  %s0 = inlined_call_operand.vmem [shape: f32[8,64], index: 0, kind: input, shape index: {}]
  %s1 = inlined_call_operand.vmem [shape: f32[8,32], index: 1, kind: input, shape index: {}]
  %s2 = inlined_call_operand.vmem [shape: f32[8,16], index: 2, kind: input, shape index: {}]
  %s3 = inlined_call_operand.vmem [shape: f32[64,48], index: 3, kind: input, shape index: {}]
  %s4 = inlined_call_operand.vmem [shape: f32[32,48], index: 4, kind: input, shape index: {}]
  %s5 = inlined_call_operand.vmem [shape: f32[16,48], index: 5, kind: input, shape index: {}]
  %s6 = inlined_call_operand.vmem [shape: f32[1,48], index: 6, kind: input, shape index: {}]
  %s7 = inlined_call_operand.vmem [shape: f32[1,48], index: 7, kind: input, shape index: {}]
  %s8 = inlined_call_operand.<no memory space> [shape: f32[1,1], index: 8, kind: input, shape index: {}]
  %s9 = inlined_call_operand.vmem [shape: f32[8,1], index: 9, kind: output, shape index: {}]
  %s10 = sld [smem:[#allocation0]]
  $region46: #{tpu_custom_call.1} parent=0
    _
  %s12 = ssub.s32 1, %s10
  %s13 = scalar_select 0, %s12, %s10
  %14 = sst [smem:[#allocation2]] %s8
  // Predicated region
  $region2: #{tpu_custom_call.1} parent=0 // pred_check
    _
  $region3: #{tpu_custom_call.1} parent=0 // pred_check_branch
    %16 = sbr.rel (0) target = $region5
  $region4: #{tpu_custom_call.1} parent=0 // pred_region
    _
  $region5: #{tpu_custom_call.1} parent=0 // pred_fallthru
    _
  // Predicated region
  $region6: #{tpu_custom_call.1} parent=0 // pred_check
    _
  $region7: #{tpu_custom_call.1} parent=0 // pred_check_branch
    %18 = sbr.rel (0) target = $region9
  $region8: #{tpu_custom_call.1} parent=0 // pred_region
    _
  $region9: #{tpu_custom_call.1} parent=0 // pred_fallthru
    _
  // Predicated region
  $region10: #{tpu_custom_call.1} parent=0 // pred_check
    _
  $region11: #{tpu_custom_call.1} parent=0 // pred_check_branch
    %20 = sbr.rel (0) target = $region13
  $region12: #{tpu_custom_call.1} parent=0 // pred_region
    _
  $region13: #{tpu_custom_call.1} parent=0 // pred_fallthru
    _
  // Predicated region
  $region14: #{tpu_custom_call.1} parent=0 // pred_check
    _
  $region15: #{tpu_custom_call.1} parent=0 // pred_check_branch
    %22 = sbr.rel (0) target = $region17
  $region16: #{tpu_custom_call.1} parent=0 // pred_region
    _
  $region17: #{tpu_custom_call.1} parent=0 // pred_fallthru
    _
  // Predicated region
  $region18: #{tpu_custom_call.1} parent=0 // pred_check
    _
  $region19: #{tpu_custom_call.1} parent=0 // pred_check_branch
    %24 = sbr.rel (0) target = $region21
  $region20: #{tpu_custom_call.1} parent=0 // pred_region
    _
  $region21: #{tpu_custom_call.1} parent=0 // pred_fallthru
    _
  // Predicated region
  $region22: #{tpu_custom_call.1} parent=0 // pred_check
    _
  $region23: #{tpu_custom_call.1} parent=0 // pred_check_branch
    %26 = sbr.rel (0) target = $region25
  $region24: #{tpu_custom_call.1} parent=0 // pred_region
    _
  $region25: #{tpu_custom_call.1} parent=0 // pred_fallthru
    _
  // Predicated region
  $region26: #{tpu_custom_call.1} parent=0 // pred_check
    _
  $region27: #{tpu_custom_call.1} parent=0 // pred_check_branch
    %28 = sbr.rel (0) target = $region29
  $region28: #{tpu_custom_call.1} parent=0 // pred_region
    _
  $region29: #{tpu_custom_call.1} parent=0 // pred_fallthru
    _
  // Predicated region
  $region30: #{tpu_custom_call.1} parent=0 // pred_check
    _
  $region31: #{tpu_custom_call.1} parent=0 // pred_check_branch
    %30 = sbr.rel (0) target = $region33
  $region32: #{tpu_custom_call.1} parent=0 // pred_region
    _
  $region33: #{tpu_custom_call.1} parent=0 // pred_fallthru
    _
  // Predicated region
  $region34: #{tpu_custom_call.1} parent=0 // pred_check
    _
  $region35: #{tpu_custom_call.1} parent=0 // pred_check_branch
    %32 = sbr.rel (0) target = $region37
  $region36: #{tpu_custom_call.1} parent=0 // pred_region
    _
  $region37: #{tpu_custom_call.1} parent=0 // pred_fallthru
    _
  %v33 = vld [vmem:[%s0] sm:$0xff]
  %v34 = vld [vmem:[%s3] sm:$0xff]
  %v35 = vld [vmem:[%s3 + $0x8] sm:$0xff]
  %v36 = vld [vmem:[%s3 + $0x10] sm:$0xff]
  %v37 = vld [vmem:[%s3 + $0x18] sm:$0xff]
  %v38 = vld [vmem:[%s3 + $0x20] sm:$0xff]
  %v39 = vld [vmem:[%s3 + $0x28] sm:$0xff]
  %v40 = vld [vmem:[%s3 + $0x30] sm:$0xff]
  %v41 = vld [vmem:[%s3 + $0x38] sm:$0xff]
  %v42 = vld [vmem:[%s1] sm:$0xff]
  %v43 = vld [vmem:[%s4] sm:$0xff]
  %v44 = vld [vmem:[%s4 + $0x8] sm:$0xff]
  %v45 = vld [vmem:[%s4 + $0x10] sm:$0xff]
  %v46 = vld [vmem:[%s4 + $0x18] sm:$0xff]
  %vm47 = vcmask 261120
  %v49 = vsel %vm47, %v42, 0
  %51 = vmatpush.msra.mxu0 0.0
  %52 = vmatpush.msra.mxu0 0.0
  %53 = vmatpush.msra.mxu0 0.0
  %54 = vmatpush.msra.mxu0 0.0
  %55 = vmatpush.msra.mxu0 0.0
  %56 = vmatpush.msra.mxu0 0.0
  %57 = vmatpush.msra.mxu0 0.0
  %58 = vmatpush.msra.mxu0 0.0
  %59 = vmatpush.msra.mxu0 0.0
  %60 = vmatpush.msra.mxu0 0.0
  %61 = vmatpush.msra.mxu0 0.0
  %62 = vmatpush.msra.mxu0 0.0
  %63 = vmatpush.msra.mxu0 %v46
  %64 = vmatpush.msra.mxu0 %v45
  %65 = vmatpush.msra.mxu0 %v44
  %66 = vmatpush.msra.mxu0 %v43
  %67 = vmatmul.f32.gmra.mxu0 %v49
  %v68 = vpop.f32.mrf.mxu0
  %v69 = vadd.f32 0.0, %v68
  %70 = vdwg.mxu0
  %vm71 = vcmask 523264
  %v73 = vsel %vm71, %v33, 0
  %75 = vmatpush.msra.mxu0 0.0
  %76 = vmatpush.msra.mxu0 0.0
  %77 = vmatpush.msra.mxu0 0.0
  %78 = vmatpush.msra.mxu0 0.0
  %79 = vmatpush.msra.mxu0 0.0
  %80 = vmatpush.msra.mxu0 0.0
  %81 = vmatpush.msra.mxu0 0.0
  %82 = vmatpush.msra.mxu0 0.0
  %83 = vmatpush.msra.mxu0 %v41
  %84 = vmatpush.msra.mxu0 %v40
  %85 = vmatpush.msra.mxu0 %v39
  %86 = vmatpush.msra.mxu0 %v38
  %87 = vmatpush.msra.mxu0 %v37
  %88 = vmatpush.msra.mxu0 %v36
  %89 = vmatpush.msra.mxu0 %v35
  %90 = vmatpush.msra.mxu0 %v34
  %91 = vmatmul.f32.gmra.mxu0 %v73
  %v92 = vpop.f32.mrf.mxu0
  %v93 = vadd.f32 %v69, %v92
  %94 = vdwg.mxu0
  %v95 = vld [vmem:[%s2] sm:$0xff]
  %v96 = vld [vmem:[%s5] sm:$0xff]
  %v97 = vld [vmem:[%s5 + $0x8] sm:$0xff]
  %vm98 = vcmask 130048
  %v100 = vsel %vm98, %v95, 0
  %102 = vmatpush.msra.mxu0 0.0
  %103 = vmatpush.msra.mxu0 0.0
  %104 = vmatpush.msra.mxu0 0.0
  %105 = vmatpush.msra.mxu0 0.0
  %106 = vmatpush.msra.mxu0 0.0
  %107 = vmatpush.msra.mxu0 0.0
  %108 = vmatpush.msra.mxu0 0.0
  %109 = vmatpush.msra.mxu0 0.0
  %110 = vmatpush.msra.mxu0 0.0
  %111 = vmatpush.msra.mxu0 0.0
  %112 = vmatpush.msra.mxu0 0.0
  %113 = vmatpush.msra.mxu0 0.0
  %114 = vmatpush.msra.mxu0 0.0
  %115 = vmatpush.msra.mxu0 0.0
  %116 = vmatpush.msra.mxu0 %v97
  %117 = vmatpush.msra.mxu0 %v96
  %118 = vmatmul.f32.gmra.mxu0 %v100
  %v119 = vpop.f32.mrf.mxu0
  %v120 = vadd.f32 0.0, %v119
  %121 = vdwg.mxu0
  %v122 = vadd.f32 %v93, %v120
  %v123 = vld [vmem:[%s6] sm:$0x1]
  %v125 = vperm.slane %v123, 0
  %v127 = vadd.f32 %v122, %v125
  %v128 = vmax.f32 %v127, 0.0
  %v129 = vld [vmem:[%s7] sm:$0x1]
  %v131 = vperm.slane %v129, 0
  %v133 = vmul.f32 %v128, %v131
  %vm134 = vcmask 392192
  %v135 = vsel %vm134, %v133, 0.0
  %136 = vadd.xlane.f32.xlu0 %v135
  %v137 = vpop.xlane.xlu0 %136
  %s138 = sld [smem:[#allocation2]]
  %v139 = vstv %s138
  %v140 = vadd.f32 %v137, %v139
  %vm141 = vcmask 7168
  %142 = vst.msk [vmem:[%s9] sm:$0xff] %vm141, %v140
  // Predicated region
  $region38: #{tpu_custom_call.1} parent=0 // pred_check
    _
  $region39: #{tpu_custom_call.1} parent=0 // pred_check_branch
    %144 = sbr.rel (0) target = $region41
  $region40: #{tpu_custom_call.1} parent=0 // pred_region
    _
  $region41: #{tpu_custom_call.1} parent=0 // pred_fallthru
    _
  // Predicated region
  $region42: #{tpu_custom_call.1} parent=0 // pred_check
    _
  $region43: #{tpu_custom_call.1} parent=0 // pred_check_branch
    %146 = sbr.rel (0) target = $region45
  $region44: #{tpu_custom_call.1} parent=0 // pred_region
    _
  $region45: #{tpu_custom_call.1} parent=0 // pred_fallthru
    _

</llo_original>
